<compile_context>
chip_gen: v7x
topology: tpu7x:2x2x1
jax: 0.10.0
libtpu: 0.0.40
codegen_flags: <defaults>
</compile_context>

<pallas_src>
import functools
import math

import jax
import jax.numpy as jnp
from jax.experimental import pallas as pl
from jax.experimental.pallas import tpu as pltpu


_TARGET_TILE_BYTES = 4 * 1024 * 1024   # ~4 MiB of f32 compute per input tile
_MIN_GRID_STEPS = 8                    # >= 4 grid steps per v7x TensorCore
_MIN_BLOCK_ROWS = 256                  # floor so tiny inputs don't over-fragment


def _sublane_multiple(dtype):
    """Row-tile alignment so sublane packing stays full for the dtype."""
    itemsize = jnp.dtype(dtype).itemsize
    if itemsize >= 4:
        return 8
    if itemsize == 2:
        return 16
    return 32


def _vmem_limit_bytes():
    """Per-generation scoped-VMEM limit: ~75% of physical, capped at 96 MiB."""
    cap = 64 * 1024 * 1024
    try:
        info = pltpu.get_tpu_info()
        cap = int(getattr(info, "vmem_capacity_bytes", cap))
    except Exception:
        pass
    # v7x (64 MiB) -> 48 MiB; v5e/v6e (128 MiB) -> 96 MiB.
    return max(32 * 1024 * 1024, min((cap * 3) // 4, 96 * 1024 * 1024))


def _layernorm_kernel(x_ref, g_ref, b_ref, o_ref, *, eps, dim):
    # x_ref: (block_rows, D) tile; g_ref/b_ref: (1, D) full params.
    # f32 compute path (mandatory on v5e: no bf16 VPU/EUP; harmless elsewhere).
    x = x_ref[...].astype(jnp.float32)
    inv_d = jnp.float32(1.0 / dim)
    # Single reduction pass: sum and sum-of-squares are two *independent*
    # reduces, vs. the dependent mean -> centered-variance chain (halves the
    # XLU reduction traffic per tile).
    s = jnp.sum(x, axis=-1, keepdims=True)
    ss = jnp.sum(x * x, axis=-1, keepdims=True)
    mean = s * inv_d
    # E[x^2] - E[x]^2 can go slightly negative from cancellation: clamp >= 0.
    var = jnp.maximum(ss * inv_d - mean * mean, 0.0)
    inv = jax.lax.rsqrt(var + eps)
    g = g_ref[...].astype(jnp.float32)
    b = b_ref[...].astype(jnp.float32)
    o_ref[...] = ((x - mean) * inv * g + b).astype(o_ref.dtype)


def layer_norm_pallas(x, gamma, beta, *, eps=1e-5, block_rows=None):
    """LayerNorm over the last axis of x (any leading shape), via Pallas."""
    orig_shape = x.shape
    d = orig_shape[-1]
    rows = int(math.prod(orig_shape[:-1])) if len(orig_shape) > 1 else 1
    x2 = x.reshape(rows, d)
    g2 = gamma.reshape(1, d)
    b2 = beta.reshape(1, d)

    itemsize = jnp.dtype(x.dtype).itemsize
    align = _sublane_multiple(x.dtype)

    if block_rows is None:
        # Size the tile by bytes of f32 compute (upcast intermediates dominate
        # VMEM), per perf review: ~4 MiB per input tile instead of a row cap.
        block_rows = max(align, _TARGET_TILE_BYTES // (d * 4))
        # Keep the grid at >= ~8 steps when rows allow (megacore sharding +
        # pipeline overlap), with a floor of a few hundred rows per step.
        per_step_cap = max(_MIN_BLOCK_ROWS, pl.cdiv(rows, _MIN_GRID_STEPS))
        block_rows = min(block_rows, per_step_cap)
    block_rows = max(align, (block_rows // align) * align)

    if rows <= block_rows:
        # Single block covering the whole row extent (always layout-legal).
        block_rows = rows
    # else: block_rows is a multiple of `align` and the ragged last block (if
    # any) is masked by Pallas -- no jnp.pad / slice, no extra HBM pass.

    grid = (pl.cdiv(rows, block_rows),)

    cost = pl.CostEstimate(
        flops=8 * rows * d,
        transcendentals=rows,
        bytes_accessed=2 * rows * d * itemsize + 2 * d * 4,
    )

    out = pl.pallas_call(
        functools.partial(_layernorm_kernel, eps=eps, dim=d),
        out_shape=jax.ShapeDtypeStruct((rows, d), x.dtype),
        grid_spec=pltpu.PrefetchScalarGridSpec(
            num_scalar_prefetch=0,
            grid=grid,
            in_specs=[
                pl.BlockSpec((block_rows, d), lambda i: (i, 0)),
                pl.BlockSpec((1, d), lambda i: (0, 0)),
                pl.BlockSpec((1, d), lambda i: (0, 0)),
            ],
            out_specs=pl.BlockSpec((block_rows, d), lambda i: (i, 0)),
        ),
        compiler_params=pltpu.CompilerParams(
            dimension_semantics=("parallel",),   # shards rows across v7x's 2 TCs
            vmem_limit_bytes=_vmem_limit_bytes(),
        ),
        cost_estimate=cost,
    )(x2, g2, b2)

    return out.reshape(orig_shape)


class PreNormPallas:
    """JAX/Pallas equivalent of the PyTorch PreNorm module."""

    def __init__(self, dim, fn, context_dim=None):
        self.fn = fn
        # nn.LayerNorm default init: weight = 1, bias = 0 (deterministic).
        self.norm_w = jnp.ones((dim,), jnp.float32)
        self.norm_b = jnp.zeros((dim,), jnp.float32)
        if context_dim is not None:
            self.norm_ctx_w = jnp.ones((context_dim,), jnp.float32)
            self.norm_ctx_b = jnp.zeros((context_dim,), jnp.float32)
        else:
            self.norm_ctx_w = None
            self.norm_ctx_b = None

    def __call__(self, x, **kwargs):
        # TODO(synk): for max perf, fuse this LayerNorm into the first matmul
        # of the wrapped `fn` (e.g. QKV projection prologue) to remove one full
        # HBM round trip; kept standalone here because `fn` is arbitrary.
        x = layer_norm_pallas(x, self.norm_w, self.norm_b)
        if self.norm_ctx_w is not None:
            context = kwargs["context"]
            # TODO(synk): for context_dim < 128 (e.g. 64), pack 128//context_dim
            # rows per 128-lane register row so the out_spec is lane-dense;
            # kept unpacked here to avoid in-kernel lane-splitting reshapes.
            normed_context = layer_norm_pallas(context, self.norm_ctx_w, self.norm_ctx_b)
            kwargs.update(context=normed_context)
        return self.fn(x, **kwargs)


if __name__ == "__main__":
    key = jax.random.PRNGKey(0)
    kx, kc, kb = jax.random.split(key, 3)

    # x: (batch, tokens, dim)       -- dim=128 keeps the lane axis dense.
    # context: (batch, ctx_tokens, context_dim)
    B, N, D = 2, 8, 128
    M, Dc = 8, 64

    x = jax.random.normal(kx, (B, N, D), jnp.float32)
    context = jax.random.normal(kc, (B, M, Dc), jnp.float32)

    # `fn` is the wrapped callable (arbitrary in the original module); use a
    # simple fn that consumes both normed inputs so context stays in the graph.
    def fn(x_normed, context=None):
        return x_normed + jnp.sum(context) * 0.0

    prenorm = PreNormPallas(dim=D, fn=fn, context_dim=Dc)
    out = prenorm(x, context=context)
    jax.block_until_ready(out)

    # Correctness check vs plain-JAX LayerNorm reference (weight=1, bias=0).
    def ln_ref(v, eps=1e-5):
        mu = jnp.mean(v, axis=-1, keepdims=True)
        var = jnp.mean((v - mu) ** 2, axis=-1, keepdims=True)
        return (v - mu) / jnp.sqrt(var + eps)

    ref = fn(ln_ref(x), context=ln_ref(context))
    assert out.shape == x.shape
    assert jnp.allclose(out, ref, atol=2e-5, rtol=1e-5)

    # Exercise the ragged-last-block path (rows not a multiple of the row
    # tile), now handled by the masked cdiv grid instead of jnp.pad + slice.
    x_odd = jax.random.normal(kx, (3, 5, D), jnp.float32)       # rows = 15
    out_odd = layer_norm_pallas(x_odd, jnp.ones((D,)), jnp.zeros((D,)), block_rows=8)
    jax.block_until_ready(out_odd)
    assert jnp.allclose(out_odd, ln_ref(x_odd), atol=2e-5, rtol=1e-5)

    # Multi-block default path with a ragged final block (rows=400, tile=256).
    x_big = jax.random.normal(kb, (4, 100, D), jnp.float32)
    out_big = layer_norm_pallas(x_big, jnp.ones((D,)), jnp.zeros((D,)))
    jax.block_until_ready(out_big)
    assert jnp.allclose(out_big, ln_ref(x_big), atol=2e-5, rtol=1e-5)

    print("KERNEL_OK")
</pallas_src>

<mosaic_0001>
module attributes {stable_mosaic.version = 11 : i64} {
  func.func @_layernorm_kernel(%arg0: i32, %arg1: memref<16x128xf32, #tpu.memory_space<vmem>>, %arg2: memref<1x128xf32, #tpu.memory_space<vmem>>, %arg3: memref<1x128xf32, #tpu.memory_space<vmem>>, %arg4: memref<16x128xf32, #tpu.memory_space<vmem>>) attributes {dimension_semantics = [#tpu.dimension_semantics<parallel>], iteration_bounds = array<i64: 1>, scalar_prefetch = 0 : i64, scratch_operands = 0 : i64, tpu.core_type = #tpu.core_type<tc>, window_params = [{transform_indices = @transform_0, window_bounds = array<i64: 16, 128>}, {pipeline_mode = #tpu.pipeline_mode<synchronous>, transform_indices = @transform_1, window_bounds = array<i64: 1, 128>}, {pipeline_mode = #tpu.pipeline_mode<synchronous>, transform_indices = @transform_2, window_bounds = array<i64: 1, 128>}, {transform_indices = @transform_3, window_bounds = array<i64: 16, 128>}]} {
    %c0 = arith.constant 0 : index
    %c0_0 = arith.constant 0 : index
    %0 = vector.load %arg1[%c0, %c0_0] : memref<16x128xf32, #tpu.memory_space<vmem>>, vector<16x128xf32>
    %cst = arith.constant dense<0.000000e+00> : vector<16xf32>
    %1 = vector.multi_reduction <add>, %0, %cst [1] : vector<16x128xf32> to vector<16xf32>
    %2 = vector.shape_cast %1 : vector<16xf32> to vector<16x1xf32>
    %3 = arith.mulf %0, %0 : vector<16x128xf32>
    %cst_1 = arith.constant dense<0.000000e+00> : vector<16xf32>
    %4 = vector.multi_reduction <add>, %3, %cst_1 [1] : vector<16x128xf32> to vector<16xf32>
    %5 = vector.shape_cast %4 : vector<16xf32> to vector<16x1xf32>
    %cst_2 = arith.constant 7.812500e-03 : f32
    %6 = vector.broadcast %cst_2 : f32 to vector<16x1xf32>
    %7 = arith.mulf %2, %6 : vector<16x1xf32>
    %cst_3 = arith.constant 7.812500e-03 : f32
    %8 = vector.broadcast %cst_3 : f32 to vector<16x1xf32>
    %9 = arith.mulf %5, %8 : vector<16x1xf32>
    %10 = arith.mulf %7, %7 : vector<16x1xf32>
    %11 = arith.subf %9, %10 : vector<16x1xf32>
    %cst_4 = arith.constant 0.000000e+00 : f32
    %12 = vector.broadcast %cst_4 : f32 to vector<16x1xf32>
    %13 = arith.maximumf %11, %12 : vector<16x1xf32>
    %cst_5 = arith.constant 9.99999974E-6 : f32
    %14 = vector.broadcast %cst_5 : f32 to vector<16x1xf32>
    %15 = arith.addf %13, %14 : vector<16x1xf32>
    %16 = math.rsqrt %15 : vector<16x1xf32>
    %c0_6 = arith.constant 0 : index
    %c0_7 = arith.constant 0 : index
    %17 = vector.load %arg2[%c0_6, %c0_7] : memref<1x128xf32, #tpu.memory_space<vmem>>, vector<1x128xf32>
    %c0_8 = arith.constant 0 : index
    %c0_9 = arith.constant 0 : index
    %18 = vector.load %arg3[%c0_8, %c0_9] : memref<1x128xf32, #tpu.memory_space<vmem>>, vector<1x128xf32>
    %19 = vector.broadcast %7 : vector<16x1xf32> to vector<16x128xf32>
    %20 = arith.subf %0, %19 : vector<16x128xf32>
    %21 = vector.broadcast %16 : vector<16x1xf32> to vector<16x128xf32>
    %22 = arith.mulf %20, %21 : vector<16x128xf32>
    %23 = vector.broadcast %17 : vector<1x128xf32> to vector<16x128xf32>
    %24 = arith.mulf %22, %23 : vector<16x128xf32>
    %25 = vector.broadcast %18 : vector<1x128xf32> to vector<16x128xf32>
    %26 = arith.addf %24, %25 : vector<16x128xf32>
    %c0_10 = arith.constant 0 : index
    %c0_11 = arith.constant 0 : index
    %27 = vector.load %arg4[%c0_10, %c0_11] : memref<16x128xf32, #tpu.memory_space<vmem>>, vector<16x128xf32>
    tpu.vector_store %arg4[%c0_10, %c0_11], %26 {strides = array<i32>} : memref<16x128xf32, #tpu.memory_space<vmem>>, vector<16x128xf32>,
    return
  }
  func.func @transform_0(%arg0: i32) -> (i32, i32) {
    %c0_i32 = arith.constant 0 : i32
    %c0_i32_0 = arith.constant 0 : i32
    return %arg0, %c0_i32 : i32, i32
  }
  func.func @transform_1(%arg0: i32) -> (i32, i32) {
    %c0_i32 = arith.constant 0 : i32
    %c0_i32_0 = arith.constant 0 : i32
    %c0_i32_1 = arith.constant 0 : i32
    return %c0_i32, %c0_i32_0 : i32, i32
  }
  func.func @transform_2(%arg0: i32) -> (i32, i32) {
    %c0_i32 = arith.constant 0 : i32
    %c0_i32_0 = arith.constant 0 : i32
    %c0_i32_1 = arith.constant 0 : i32
    return %c0_i32, %c0_i32_0 : i32, i32
  }
  func.func @transform_3(%arg0: i32) -> (i32, i32) {
    %c0_i32 = arith.constant 0 : i32
    %c0_i32_0 = arith.constant 0 : i32
    return %arg0, %c0_i32 : i32, i32
  }
}

</mosaic_0001>

<llo_original>
// kernel: tpu_custom_call.1
$region0: #{tpu_custom_call.1}
  #allocation0 [shape = 'u32[]', space=smem, size = 0x4, offset = 0x4, fixed_abs, tag = 'smem constant byte address 0x4 - core index']
  #allocation1 [shape = 'u32[144,128]{1,0:T(1,128)}', space=vmem, size = 0x12000, scoped, tag = 'internal scratch']
  %s0 = inlined_call_operand.hbm [shape: f32[16,128], index: 0, kind: input, shape index: {}]
  %s1 = inlined_call_operand.vmem [shape: f32[1,128], index: 1, kind: input, shape index: {}]
  %s2 = inlined_call_operand.vmem [shape: f32[1,128], index: 2, kind: input, shape index: {}]
  %s3 = inlined_call_operand.hbm [shape: f32[16,128], index: 3, kind: output, shape index: {}]
  %s4 = sld [smem:[#allocation0]]
  $region26: #{tpu_custom_call.1} parent=0
    _
  %s6 = ssub.s32 1, %s4
  %s7 = scalar_select 0, %s6, %s4
  $region1: #{tpu_custom_call.1} parent=0
    #allocation2 [shape = 'u8[8192]{0}', space=vmem, size = 0x2000, scoped, tag = 'input window, operand 0, single buffered']
    #allocation3 [shape = 's32[1]{0}', space=sflag, size = 0x4, scoped, tag = 'scoped memory for tpu_custom_call.1']
    #allocation4 [shape = 's32[1]{0}', space=sflag, size = 0x4, scoped, tag = 'scoped memory for tpu_custom_call.1']
    #allocation5 [shape = 'u8[8192]{0}', space=vmem, size = 0x2000, scoped, tag = 'output window, operand 0, single buffered']
    %8 = vsyncpa [#allocation3], 0
    %9 = vsyncpa [#allocation4], 0
    // Predicated region
    $region2: #{tpu_custom_call.1} parent=1 // pred_check
      _
    $region3: #{tpu_custom_call.1} parent=1 // pred_check_branch
      %11 = sbr.rel (0) target = $region5
    $region4: #{tpu_custom_call.1} parent=1 // pred_region
      %s13 = ssub.s32 256, 256
      %14 = vsyncadd [#allocation3], %s13
      %s15 = sshll.u32 [#allocation2], 4
      %s16 = int_to_ptr.vmem [resolvable:$true] %s15
      %21 = dma.hbm_to_vmem [thread:$0]  %s0, 256, %s16, [#allocation3], 128, 128, 8
    $region5: #{tpu_custom_call.1} parent=1 // pred_fallthru
      _
    // Predicated region
    $region6: #{tpu_custom_call.1} parent=1 // pred_check
      _
    $region7: #{tpu_custom_call.1} parent=1 // pred_check_branch
      %23 = sbr.rel (0) target = $region9
    $region8: #{tpu_custom_call.1} parent=1 // pred_region
      _
    $region9: #{tpu_custom_call.1} parent=1 // pred_fallthru
      _
    // Predicated region
    $region10: #{tpu_custom_call.1} parent=1 // pred_check
      _
    $region11: #{tpu_custom_call.1} parent=1 // pred_check_branch
      %25 = sbr.rel (0) target = $region13
    $region12: #{tpu_custom_call.1} parent=1 // pred_region
      _
    $region13: #{tpu_custom_call.1} parent=1 // pred_fallthru
      _
    // Predicated region
    $region14: #{tpu_custom_call.1} parent=1 // pred_check
      _
    $region15: #{tpu_custom_call.1} parent=1 // pred_check_branch
      %27 = sbr.rel (0) target = $region17
    $region16: #{tpu_custom_call.1} parent=1 // pred_region
      %28 = dma.done [#allocation3], 256
    $region17: #{tpu_custom_call.1} parent=1 // pred_fallthru
      _
    %v29 = vld [vmem:[#allocation2] sm:$0xff]
    %v30 = vld [vmem:[#allocation2 + $0x8] sm:$0xff]
    %31 = vadd.xlane.f32.xlu0 %v29
    %v32 = vpop.xlane.xlu0 %31
    %33 = vadd.xlane.f32.xlu0 %v30
    %v34 = vpop.xlane.xlu0 %33
    %v35 = vmul.f32 %v29, %v29
    %v36 = vmul.f32 %v30, %v30
    %37 = vadd.xlane.f32.xlu0 %v35
    %v38 = vpop.xlane.xlu0 %37
    %39 = vadd.xlane.f32.xlu0 %v36
    %v40 = vpop.xlane.xlu0 %39
    %v41 = vmul.f32 %v32, 0.0078125
    %v42 = vmul.f32 %v34, 0.0078125
    %v43 = vmul.f32 %v38, 0.0078125
    %v44 = vmul.f32 %v40, 0.0078125
    %v45 = vmul.f32 %v41, %v41
    %v46 = vmul.f32 %v42, %v42
    %v47 = vsub.f32 %v43, %v45
    %v48 = vsub.f32 %v44, %v46
    %v49 = vmax.f32 %v47, 0.0
    %v50 = vmax.f32 %v48, 0.0
    %v51 = vadd.f32 %v49, 1e-05
    %v52 = vadd.f32 %v50, 1e-05
    %v53 = vrsqrt.pop %v51
    %v54 = vrsqrt.pop %v52
    %v55 = vld [vmem:[%s1] sm:$0x1]
    %v56 = vld [vmem:[%s2] sm:$0x1]
    %v57 = vsub.f32 %v29, %v41
    %v58 = vsub.f32 %v30, %v42
    %v59 = vmul.f32 %v57, %v53
    %v60 = vmul.f32 %v58, %v54
    %v62 = vlaneseq
    %v63 = vshrl.u32 %v62, 7
    %v64 = vsub.s32 0, %v63
    %v65 = vrot.slane %v55, %v64
    %v67 = vmul.f32 %v59, %v65
    %v68 = vmul.f32 %v60, %v65
    %v70 = vlaneseq
    %v71 = vshrl.u32 %v70, 7
    %v72 = vsub.s32 0, %v71
    %v73 = vrot.slane %v56, %v72
    %v75 = vadd.f32 %v67, %v73
    %v76 = vadd.f32 %v68, %v73
    %77 = vst [vmem:[#allocation5] sm:$0xff] %v75
    %78 = vst [vmem:[#allocation5 + $0x8] sm:$0xff] %v76
    // Predicated region
    $region18: #{tpu_custom_call.1} parent=1 // pred_check
      _
    $region19: #{tpu_custom_call.1} parent=1 // pred_check_branch
      %80 = sbr.rel (0) target = $region21
    $region20: #{tpu_custom_call.1} parent=1 // pred_region
      %s82 = ssub.s32 256, 256
      %83 = vsyncadd [#allocation4], %s82
      %s84 = sshll.u32 [#allocation5], 4
      %s85 = int_to_ptr.vmem [resolvable:$true] %s84
      %90 = dma.vmem_to_hbm [thread:$0]  %s85, 256, %s3, [#allocation4], 128, 128, 8
    $region21: #{tpu_custom_call.1} parent=1 // pred_fallthru
      _
    // Predicated region
    $region22: #{tpu_custom_call.1} parent=1 // pred_check
      _
    $region23: #{tpu_custom_call.1} parent=1 // pred_check_branch
      %92 = sbr.rel (0) target = $region25
    $region24: #{tpu_custom_call.1} parent=1 // pred_region
      %93 = dma.done [#allocation4], 256
    $region25: #{tpu_custom_call.1} parent=1 // pred_fallthru
      _
    %94 = vsyncpa [#allocation3], 1
    %95 = vsyncpa [#allocation4], 1

</llo_original>
